<compile_context>
chip_gen: v5e
topology: v5e:2x2
jax: 0.10.0
libtpu: 0.0.40
codegen_flags: <defaults>
</compile_context>

<pallas_src>
import jax
import jax.numpy as jnp
from jax import lax
from jax.experimental import pallas as pl
from jax.experimental.pallas import tpu as pltpu


def _round_up(v, m):
    return ((v + m - 1) // m) * m


def _round_down(v, m):
    return (v // m) * m


def anchor_loss2(x, anchors, y, *, tile_bytes=4 << 20, tile_rows=None):
    """x: (N, D) float, anchors: (C, D) float, y: (N,) int labels -> scalar f32.

    tile_bytes: VMEM budget for one (lane-padded) x tile buffer.
    tile_rows:  optional explicit row-tile override (testing / tuning).
    """
    n, d = x.shape
    c, d2 = anchors.shape
    assert d == d2, "feature dims of x and anchors must match"

    itemsize = jnp.dtype(x.dtype).itemsize
    d_pad = _round_up(d, 128)          # x tile occupies round_up(D,128) lanes in VMEM

    # ---- tile selection (no HBM padding of x) -----------------------------
    if n < 128:
        tile = n                       # single full-array block (dims == array dims)
    else:
        max_aligned = _round_down(n, 128)                  # largest 128-aligned tile <= n
        budget_rows = max(128, _round_down(tile_bytes // (d_pad * itemsize), 128))
        tile = min(budget_rows, max_aligned)
        if tile_rows is not None:
            tile = min(max(128, _round_down(int(tile_rows), 128)), max_aligned)

    # Generation-aware VMEM ceiling.
    try:
        phys_vmem = int(pltpu.get_tpu_info().vmem_capacity_bytes)
    except Exception:
        phys_vmem = 64 << 20           # smallest current per-TC VMEM (v7x)
    vmem_cap = int(phys_vmem * 0.72)   # ~46 MiB on v7x, ~92 MiB on v5e/v6e

    c_pad = _round_up(c, 8)

    def _est_vmem(t):
        x_buf = t * d_pad * itemsize                 # one x tile (lane padded)
        y_buf = 8 * t * 4                            # (1, t) i32, sublane padded
        onehot = 2 * c_pad * t * 4                   # bool mask + f32 one-hot
        x_tmp = 2 * t * d_pad * 4                    # masked / f32 temp copies
        rhs = t * 128 * 4                            # (t, 2) stats rhs, lane padded
        outs = 2 * (c_pad * d_pad + c_pad * 128) * 4
        return 2 * (x_buf + y_buf) + onehot + x_tmp + rhs + outs + (2 << 20)

    while tile > 128 and _est_vmem(tile) > vmem_cap:
        tile = max(128, _round_down(tile // 2, 128))

    num_blocks = (n + tile - 1) // tile
    n_par = 2 if num_blocks >= 2 else 1              # v7x: one chunk per TensorCore
    t_inner = (num_blocks + n_par - 1) // n_par
    last_blk = num_blocks - 1

    y_row = y.reshape(1, n).astype(jnp.int32)

    # ---- streaming kernel: accumulate per-class stats ----------------------
    def kernel(x_ref, y_ref, xc_ref, st_ref):
        t = pl.program_id(1)

        @pl.when(t == 0)
        def _init():
            xc_ref[...] = jnp.zeros_like(xc_ref)
            st_ref[...] = jnp.zeros_like(st_ref)

        blk = pl.program_id(0) * t_inner + t         # logical block index
        row0 = blk * tile

        xt = x_ref[...]                              # (tile, D), native dtype
        yt = y_ref[...]                              # (1, tile) int32

        # Row validity (global row < n).  Both the x rows and the one-hot
        # columns must be masked: the OOB tail of a partial block holds
        # unspecified data (0 * NaN would still be NaN).
        col_iota = lax.broadcasted_iota(jnp.int32, (tile, 1), 0)
        lane_iota = lax.broadcasted_iota(jnp.int32, (1, tile), 1)
        valid_col = (row0 + col_iota) < n            # (tile, 1)
        valid_row = (row0 + lane_iota) < n           # (1, tile)

        x_m = jnp.where(valid_col, xt, jnp.zeros((), xt.dtype))
        x_f32 = x_m.astype(jnp.float32)

        # Lane-dense transposed one-hot (C, tile): matmul output lane dim is D.
        class_iota = lax.broadcasted_iota(jnp.int32, (c, tile), 0)
        hit = (yt == class_iota) & valid_row
        onehot_f32 = hit.astype(jnp.float32)
        onehot_mm = onehot_f32 if xt.dtype == jnp.float32 else hit.astype(xt.dtype)

        # Per-class feature sums: (C, tile) @ (tile, D) -> (C, D).
        xc_ref[...] += lax.dot_general(
            onehot_mm, x_m, (((1,), (0,)), ((), ())),
            preferred_element_type=jnp.float32)

        # Per-class [sum ||x||^2, count] fused in one matmul: (C, tile) @ (tile, 2).
        x2 = jnp.sum(x_f32 * x_f32, axis=-1, keepdims=True)      # (tile, 1)
        two_iota = lax.broadcasted_iota(jnp.int32, (tile, 2), 1)
        rhs = jnp.where(two_iota == 0, x2, jnp.float32(1.0))     # (tile, 2)
        st_ref[...] += lax.dot_general(
            onehot_f32, rhs, (((1,), (0,)), ((), ())),
            preferred_element_type=jnp.float32)

    # Index maps: clamp the logical block index so fully-out-of-range blocks
    # of the (possibly ragged) last parallel chunk reuse the last real block;
    # their contribution is zeroed by the validity mask above.
    def x_map(p, t):
        return (jnp.minimum(p * t_inner + t, last_blk), 0)

    def y_map(p, t):
        return (0, jnp.minimum(p * t_inner + t, last_blk))

    cp = dict(dimension_semantics=("parallel", "arbitrary"))
    need = _est_vmem(tile)
    if need > (16 << 20):
        cp["vmem_limit_bytes"] = int(min(max(need, 32 << 20), vmem_cap))

    xc_parts, st_parts = pl.pallas_call(
        kernel,
        out_shape=(jax.ShapeDtypeStruct((n_par, c, d), jnp.float32),
                   jax.ShapeDtypeStruct((n_par, c, 2), jnp.float32)),
        grid_spec=pltpu.PrefetchScalarGridSpec(
            num_scalar_prefetch=0,
            grid=(n_par, t_inner),
            in_specs=[
                pl.BlockSpec((tile, d), x_map),      # x tile (streamed)
                pl.BlockSpec((1, tile), y_map),      # labels (lane-dense)
            ],
            out_specs=[
                pl.BlockSpec((None, c, d), lambda p, t: (p, 0, 0)),  # Xc partials
                pl.BlockSpec((None, c, 2), lambda p, t: (p, 0, 0)),  # [sumX2, counts]
            ],
        ),
        compiler_params=pltpu.CompilerParams(**cp),
    )(x, y_row)

    # ---- tiny epilogue in plain JAX (combines the per-chunk partials) ------
    xc = jnp.sum(xc_parts, axis=0)                   # (C, D)
    st = jnp.sum(st_parts, axis=0)                   # (C, 2)
    sumx2, counts = st[:, 0], st[:, 1]

    a = anchors.astype(jnp.float32)
    a2 = jnp.sum(a * a, axis=1)                                      # (C,)
    diag = sumx2 + counts * a2 - 2.0 * jnp.sum(xc * a, axis=1)       # S[L,L]
    rowsum = (jnp.float32(c) * sumx2 + counts * jnp.sum(a2)
              - 2.0 * (xc @ jnp.sum(a, axis=0)))                     # sum_j S[L,j]
    safe_denom = jnp.where(counts > 0, counts * jnp.float32(d), 1.0)
    # reject_threshold = 0 -> only classes with count > 0 contribute.
    contrib = jnp.where(counts > 0, (2.0 * diag - rowsum) / safe_denom, 0.0)
    return jnp.sum(contrib)


def reference_loss(x, anchors, y):
    """Pure-JAX re-implementation of the PyTorch loop (for verification)."""
    num_class = anchors.shape[0]
    loss = jnp.float32(0.0)
    for label in range(num_class):
        mask = (y == label)
        cnt = int(jnp.sum(mask))
        if cnt <= 0:  # reject_threshold = 0
            continue
        cur = x[mask]
        loss1 = jnp.mean((cur - anchors[label]) ** 2)
        loss2 = jnp.float32(0.0)
        for j in range(num_class):
            if j != label:
                loss2 = loss2 + jnp.mean((cur - anchors[j]) ** 2)
        loss = loss + (loss1 - loss2)
    return loss


if __name__ == "__main__":
    # Small deterministic setup.  N is deliberately not a multiple of 128 so
    # partial (masked) blocks and the two-chunk parallel split are exercised.
    # Labels only cover classes 0..C-2 so the count==0 (reject) path is hit.
    N, D, C = 300, 32, 4
    key = jax.random.PRNGKey(0)
    k_anchor, k_x, k_y = jax.random.split(key, 3)

    anchors = jax.random.normal(k_anchor, (C, D), dtype=jnp.float32)  # self.anchors
    x = jax.random.normal(k_x, (N, D), dtype=jnp.float32)
    y = jax.random.randint(k_y, (N,), 0, C - 1, dtype=jnp.int32)

    ref = reference_loss(x, anchors, y)

    # Default path: budget-sized tile (-> 256-row tiles here, 2 blocks over
    # 2 parallel chunks, partial last block masked in-kernel).
    loss_a = jax.block_until_ready(anchor_loss2(x, anchors, y))
    # Forced small tiles: 128-row tiles -> 3 blocks over 2 chunks; the ragged
    # chunk contains one fully-out-of-range (clamped + masked) block.
    loss_b = jax.block_until_ready(anchor_loss2(x, anchors, y, tile_rows=128))

    assert jnp.allclose(loss_a, ref, rtol=1e-3, atol=1e-3), (loss_a, ref)
    assert jnp.allclose(loss_b, ref, rtol=1e-3, atol=1e-3), (loss_b, ref)

    print("KERNEL_OK")
</pallas_src>

<mosaic_0001>
module attributes {stable_mosaic.version = 11 : i64} {
  func.func @kernel(%arg0: i32, %arg1: i32, %arg2: memref<256x32xf32, #tpu.memory_space<vmem>>, %arg3: memref<1x256xi32, #tpu.memory_space<vmem>>, %arg4: memref<1x4x32xf32, #tpu.memory_space<vmem>>, %arg5: memref<1x4x2xf32, #tpu.memory_space<vmem>>) attributes {dimension_semantics = [#tpu.dimension_semantics<parallel>, #tpu.dimension_semantics<arbitrary>], iteration_bounds = array<i64: 2, 1>, scalar_prefetch = 0 : i64, scratch_operands = 0 : i64, tpu.core_type = #tpu.core_type<tc>, window_params = [{transform_indices = @transform_0, window_bounds = array<i64: 256, 32>}, {transform_indices = @transform_1, window_bounds = array<i64: 1, 256>}, {transform_indices = @transform_2, window_bounds = array<i64: 1, 4, 32>}, {transform_indices = @transform_3, window_bounds = array<i64: 1, 4, 2>}]} {
    %c0_i32 = arith.constant 0 : i32
    %0 = arith.cmpi eq, %arg1, %c0_i32 : i32
    %1 = arith.extui %0 : i1 to i32
    %c0_i32_0 = arith.constant 0 : i32
    %2 = arith.cmpi ne, %1, %c0_i32_0 : i32
    scf.if %2 {
      %cst_22 = arith.constant 0.000000e+00 : f32
      %53 = vector.broadcast %cst_22 : f32 to vector<4x32xf32>
      %c0_23 = arith.constant 0 : index
      %c0_24 = arith.constant 0 : index
      %c0_25 = arith.constant 0 : index
      %54 = vector.load %arg4[%c0_23, %c0_24, %c0_25] : memref<1x4x32xf32, #tpu.memory_space<vmem>>, vector<1x4x32xf32>
      %55 = vector.shape_cast %54 : vector<1x4x32xf32> to vector<4x32xf32>
      %56 = vector.shape_cast %53 : vector<4x32xf32> to vector<1x4x32xf32>
      tpu.vector_store %arg4[%c0_23, %c0_24, %c0_25], %56 {strides = array<i32>} : memref<1x4x32xf32, #tpu.memory_space<vmem>>, vector<1x4x32xf32>,
      %cst_26 = arith.constant 0.000000e+00 : f32
      %57 = vector.broadcast %cst_26 : f32 to vector<4x2xf32>
      %c0_27 = arith.constant 0 : index
      %c0_28 = arith.constant 0 : index
      %c0_29 = arith.constant 0 : index
      %58 = vector.load %arg5[%c0_27, %c0_28, %c0_29] : memref<1x4x2xf32, #tpu.memory_space<vmem>>, vector<1x4x2xf32>
      %59 = vector.shape_cast %58 : vector<1x4x2xf32> to vector<4x2xf32>
      %60 = vector.shape_cast %57 : vector<4x2xf32> to vector<1x4x2xf32>
      tpu.vector_store %arg5[%c0_27, %c0_28, %c0_29], %60 {strides = array<i32>} : memref<1x4x2xf32, #tpu.memory_space<vmem>>, vector<1x4x2xf32>,
    } else {
    }
    %c1_i32 = arith.constant 1 : i32
    %3 = arith.muli %arg0, %c1_i32 : i32
    %4 = arith.addi %3, %arg1 : i32
    %c256_i32 = arith.constant 256 : i32
    %5 = arith.muli %4, %c256_i32 : i32
    %c0 = arith.constant 0 : index
    %c0_1 = arith.constant 0 : index
    %6 = vector.load %arg2[%c0, %c0_1] : memref<256x32xf32, #tpu.memory_space<vmem>>, vector<256x32xf32>
    %c0_2 = arith.constant 0 : index
    %c0_3 = arith.constant 0 : index
    %7 = vector.load %arg3[%c0_2, %c0_3] : memref<1x256xi32, #tpu.memory_space<vmem>>, vector<1x256xi32>
    %8 = tpu.iota {dimensions = array<i32: 0>} : vector<256x1xi32>
    %9 = tpu.iota {dimensions = array<i32: 1>} : vector<1x256xi32>
    %10 = vector.broadcast %5 : i32 to vector<256x1xi32>
    %11 = arith.addi %10, %8 : vector<256x1xi32>
    %c300_i32 = arith.constant 300 : i32
    %12 = vector.broadcast %c300_i32 : i32 to vector<256x1xi32>
    %13 = arith.cmpi slt, %11, %12 : vector<256x1xi32>
    %14 = vector.broadcast %5 : i32 to vector<1x256xi32>
    %15 = arith.addi %14, %9 : vector<1x256xi32>
    %c300_i32_4 = arith.constant 300 : i32
    %16 = vector.broadcast %c300_i32_4 : i32 to vector<1x256xi32>
    %17 = arith.cmpi slt, %15, %16 : vector<1x256xi32>
    %cst = arith.constant 0.000000e+00 : f32
    %18 = vector.shape_cast %13 : vector<256x1xi1> to vector<256x1xi1>
    %19 = vector.broadcast %18 : vector<256x1xi1> to vector<256x32xi1>
    %20 = vector.broadcast %cst : f32 to vector<256x32xf32>
    %21 = arith.select %19, %6, %20 : vector<256x32xi1>, vector<256x32xf32>
    %22 = tpu.iota {dimensions = array<i32: 0>} : vector<4x256xi32>
    %23 = vector.broadcast %7 : vector<1x256xi32> to vector<4x256xi32>
    %24 = arith.cmpi eq, %23, %22 : vector<4x256xi32>
    %25 = vector.broadcast %17 : vector<1x256xi1> to vector<4x256xi1>
    %26 = arith.andi %24, %25 : vector<4x256xi1>
    %27 = arith.extui %26 : vector<4x256xi1> to vector<4x256xi32>
    %28 = arith.sitofp %27 : vector<4x256xi32> to vector<4x256xf32>
    %c0_5 = arith.constant 0 : index
    %c0_6 = arith.constant 0 : index
    %c0_7 = arith.constant 0 : index
    %29 = vector.load %arg4[%c0_5, %c0_6, %c0_7] : memref<1x4x32xf32, #tpu.memory_space<vmem>>, vector<1x4x32xf32>
    %30 = vector.shape_cast %29 : vector<1x4x32xf32> to vector<4x32xf32>
    %cst_8 = arith.constant dense<0.000000e+00> : vector<4x32xf32>
    %31 = tpu.matmul %28, %21, %cst_8 {dimension_numbers = #tpu.dot_dimension_numbers<[1], [0], [0], [1], [0, 0, 1, 1], [], []>} : vector<4x256xf32>, vector<256x32xf32>, vector<4x32xf32> -> vector<4x32xf32>
    %32 = arith.addf %30, %31 : vector<4x32xf32>
    %c0_9 = arith.constant 0 : index
    %c0_10 = arith.constant 0 : index
    %c0_11 = arith.constant 0 : index
    %33 = vector.load %arg4[%c0_9, %c0_10, %c0_11] : memref<1x4x32xf32, #tpu.memory_space<vmem>>, vector<1x4x32xf32>
    %34 = vector.shape_cast %33 : vector<1x4x32xf32> to vector<4x32xf32>
    %35 = vector.shape_cast %32 : vector<4x32xf32> to vector<1x4x32xf32>
    tpu.vector_store %arg4[%c0_9, %c0_10, %c0_11], %35 {strides = array<i32>} : memref<1x4x32xf32, #tpu.memory_space<vmem>>, vector<1x4x32xf32>,
    %36 = arith.mulf %21, %21 : vector<256x32xf32>
    %cst_12 = arith.constant dense<0.000000e+00> : vector<256xf32>
    %37 = vector.multi_reduction <add>, %36, %cst_12 [1] : vector<256x32xf32> to vector<256xf32>
    %38 = vector.shape_cast %37 : vector<256xf32> to vector<256x1xf32>
    %39 = tpu.iota {dimensions = array<i32: 1>} : vector<256x2xi32>
    %c0_i32_13 = arith.constant 0 : i32
    %40 = vector.broadcast %c0_i32_13 : i32 to vector<256x2xi32>
    %41 = arith.cmpi eq, %39, %40 : vector<256x2xi32>
    %cst_14 = arith.constant 1.000000e+00 : f32
    %42 = vector.shape_cast %38 : vector<256x1xf32> to vector<256x1xf32>
    %43 = vector.broadcast %42 : vector<256x1xf32> to vector<256x2xf32>
    %44 = vector.broadcast %cst_14 : f32 to vector<256x2xf32>
    %45 = arith.select %41, %43, %44 : vector<256x2xi1>, vector<256x2xf32>
    %c0_15 = arith.constant 0 : index
    %c0_16 = arith.constant 0 : index
    %c0_17 = arith.constant 0 : index
    %46 = vector.load %arg5[%c0_15, %c0_16, %c0_17] : memref<1x4x2xf32, #tpu.memory_space<vmem>>, vector<1x4x2xf32>
    %47 = vector.shape_cast %46 : vector<1x4x2xf32> to vector<4x2xf32>
    %cst_18 = arith.constant dense<0.000000e+00> : vector<4x2xf32>
    %48 = tpu.matmul %28, %45, %cst_18 {dimension_numbers = #tpu.dot_dimension_numbers<[1], [0], [0], [1], [0, 0, 1, 1], [], []>} : vector<4x256xf32>, vector<256x2xf32>, vector<4x2xf32> -> vector<4x2xf32>
    %49 = arith.addf %47, %48 : vector<4x2xf32>
    %c0_19 = arith.constant 0 : index
    %c0_20 = arith.constant 0 : index
    %c0_21 = arith.constant 0 : index
    %50 = vector.load %arg5[%c0_19, %c0_20, %c0_21] : memref<1x4x2xf32, #tpu.memory_space<vmem>>, vector<1x4x2xf32>
    %51 = vector.shape_cast %50 : vector<1x4x2xf32> to vector<4x2xf32>
    %52 = vector.shape_cast %49 : vector<4x2xf32> to vector<1x4x2xf32>
    tpu.vector_store %arg5[%c0_19, %c0_20, %c0_21], %52 {strides = array<i32>} : memref<1x4x2xf32, #tpu.memory_space<vmem>>, vector<1x4x2xf32>,
    return
  }
  func.func @transform_0(%arg0: i32, %arg1: i32) -> (i32, i32) {
    %c1_i32 = arith.constant 1 : i32
    %0 = arith.muli %arg0, %c1_i32 : i32
    %1 = arith.addi %0, %arg1 : i32
    %c1_i32_0 = arith.constant 1 : i32
    %2 = arith.minsi %1, %c1_i32_0 : i32
    %c0_i32 = arith.constant 0 : i32
    %c0_i32_1 = arith.constant 0 : i32
    return %2, %c0_i32 : i32, i32
  }
  func.func @transform_1(%arg0: i32, %arg1: i32) -> (i32, i32) {
    %c1_i32 = arith.constant 1 : i32
    %0 = arith.muli %arg0, %c1_i32 : i32
    %1 = arith.addi %0, %arg1 : i32
    %c1_i32_0 = arith.constant 1 : i32
    %2 = arith.minsi %1, %c1_i32_0 : i32
    %c0_i32 = arith.constant 0 : i32
    %c0_i32_1 = arith.constant 0 : i32
    return %c0_i32, %2 : i32, i32
  }
  func.func @transform_2(%arg0: i32, %arg1: i32) -> (i32, i32, i32) {
    %c0_i32 = arith.constant 0 : i32
    %c0_i32_0 = arith.constant 0 : i32
    %c0_i32_1 = arith.constant 0 : i32
    return %arg0, %c0_i32, %c0_i32_0 : i32, i32, i32
  }
  func.func @transform_3(%arg0: i32, %arg1: i32) -> (i32, i32, i32) {
    %c0_i32 = arith.constant 0 : i32
    %c0_i32_0 = arith.constant 0 : i32
    %c0_i32_1 = arith.constant 0 : i32
    return %arg0, %c0_i32, %c0_i32_0 : i32, i32, i32
  }
}

</mosaic_0001>

<llo_original>
// kernel: tpu_custom_call.1
$region0: #{tpu_custom_call.1}
  #allocation0 [shape = 'u32[]', space=smem, size = 0x4, offset = 0x4, fixed_abs, tag = 'smem constant byte address 0x4 - core index']
  #allocation1 [shape = 'u32[72,128]{1,0:T(1,128)}', space=vmem, size = 0x9000, scoped, tag = 'internal scratch']
  %s0 = inlined_call_operand.vmem [shape: f32[300,32], index: 0, kind: input, shape index: {}]
  %s1 = inlined_call_operand.vmem [shape: s32[1,300], index: 1, kind: input, shape index: {}]
  %s2 = inlined_call_operand.hbm [shape: f32[2,4,32], index: 2, kind: output, shape index: {0}]
  %s3 = inlined_call_operand.vmem [shape: f32[2,4,2], index: 3, kind: output, shape index: {1}]
  %4 = xla_tuple %s2, %s3
  %s5 = sld [smem:[#allocation0]]
  $region53: #{tpu_custom_call.1} parent=0
    _
  %s7 = ssub.s32 1, %s5
  %s8 = scalar_select 0, %s7, %s5
  $region1: #{tpu_custom_call.1} parent=0
    #allocation2 [shape = 'u8[4096]{0}', space=vmem, size = 0x1000, scoped, tag = 'output window, operand 0']
    #allocation3 [shape = 's32[2]{0}', space=sflag, size = 0x8, scoped, tag = 'scoped memory for tpu_custom_call.1']
    %9 = vsyncpa [#allocation3], 0
    %s10 = scalar_lea.sflag [#allocation3], 1
    %11 = vsyncpa %s10, 0
    loop: start=0, step=1, limit=4
    $region2: #{tpu_custom_call.1} parent=1 // loop_pre_header
      _
    $region3: #{tpu_custom_call.1} parent=1 // loop_header
      %s13 = sphi 0, %s17
      %p14 = scmp.ge.s32.totalorder %s13, 4
      %s20 = sphi 0, %s32
      %s21 = sphi 0, %s28
      %s22 = sphi 0, %s20
      %s23 = sphi 0, %s21
      %s24 = sphi 0, %s22
      %s25 = sphi 0, %s23
      %s41 = sphi 0, %s43
      %s44 = sphi 0, %s41
      %s45 = sphi 0, %s44
      %s61 = sphi 0, %s45
      %s73 = sphi 0, %s75
      %s76 = sphi 0, %s73
      %s77 = sphi 0, %s76
      %s93 = sphi 0, %s77
      %s99 = sphi 0, %s101
      %s102 = sphi 0, %s99
      %s103 = sphi 0, %s102
      %s119 = sphi 0, %s103
      %s125 = sphi 0, %s127
      %s128 = sphi 0, %s125
      %s129 = sphi 0, %s128
      %s145 = sphi 0, %s129
    $region4: #{tpu_custom_call.1} parent=1 // loop_header_branch
      %16 = sbr.rel (%p14) target = $region8
    $region5: #{tpu_custom_call.1} parent=1 // loop_body
      %s18 = ssub.s32 %s13, 1
      %s19 = ssub.s32 %s13, 2
      %s26 = sadd.s32 1, %s21
      %p27 = scmp.ge.s32.totalorder %s26, 1
      %s28 = scalar_select %p27, 0, %s26
      %s29 = sadd.s32 1, %s20
      %s30 = scalar_select %p27, %s29, %s20
      %p31 = scmp.ge.s32.totalorder %s30, 2
      %s32 = scalar_select %p31, 0, %s30
      %s33 = sadd.s32 %s20, %s21
      %p34 = scmp.lt.s32.totalorder %s33, 1
      %s35 = scalar_select %p34, %s33, 1
      %s36 = sadd.s32 %s32, %s28
      %p37 = scmp.lt.s32.totalorder %s36, 1
      %s38 = scalar_select %p37, %s36, 1
      %s39 = ssub.s32 %s35, %s38
      %p40 = scmp.eq.s32.totalorder %s39, 0
      %s42 = sadd.s32 %s41, 1
      %s43 = scalar_select %p40, %s41, %s42
      %p46 = pneg %p40
      %p47 = scmp.eq.s32.totalorder %s13, 1
      %p48 = por %p46, %p47
      %p49 = scmp.ne.s32.totalorder %s41, %s44
      %p50 = scmp.eq.s32.totalorder %s13, 0
      %p51 = por %p49, %p50
      %p52 = scmp.ne.s32.totalorder %s41, %s44
      %p53 = scmp.eq.s32.totalorder %s18, 1
      %p54 = por %p52, %p53
      %p55 = scmp.ne.s32.totalorder %s44, %s45
      %p56 = scmp.eq.s32.totalorder %s18, 0
      %p57 = por %p55, %p56
      %p58 = scmp.ne.s32.totalorder %s44, %s45
      %p59 = scmp.eq.s32.totalorder %s19, 1
      %p60 = por %p58, %p59
      %p62 = scmp.ne.s32.totalorder %s45, %s61
      %p63 = scmp.eq.s32.totalorder %s19, 0
      %p64 = por %p62, %p63
      %s65 = sadd.s32 %s20, %s21
      %p66 = scmp.lt.s32.totalorder %s65, 1
      %s67 = scalar_select %p66, %s65, 1
      %s68 = sadd.s32 %s32, %s28
      %p69 = scmp.lt.s32.totalorder %s68, 1
      %s70 = scalar_select %p69, %s68, 1
      %s71 = ssub.s32 %s67, %s70
      %p72 = scmp.eq.s32.totalorder %s71, 0
      %s74 = sadd.s32 %s73, 1
      %s75 = scalar_select %p72, %s73, %s74
      %p78 = pneg %p72
      %p79 = scmp.eq.s32.totalorder %s13, 1
      %p80 = por %p78, %p79
      %p81 = scmp.ne.s32.totalorder %s73, %s76
      %p82 = scmp.eq.s32.totalorder %s13, 0
      %p83 = por %p81, %p82
      %p84 = scmp.ne.s32.totalorder %s73, %s76
      %p85 = scmp.eq.s32.totalorder %s18, 1
      %p86 = por %p84, %p85
      %p87 = scmp.ne.s32.totalorder %s76, %s77
      %p88 = scmp.eq.s32.totalorder %s18, 0
      %p89 = por %p87, %p88
      %p90 = scmp.ne.s32.totalorder %s76, %s77
      %p91 = scmp.eq.s32.totalorder %s19, 1
      %p92 = por %p90, %p91
      %p94 = scmp.ne.s32.totalorder %s77, %s93
      %p95 = scmp.eq.s32.totalorder %s19, 0
      %p96 = por %p94, %p95
      %s97 = ssub.s32 %s20, %s32
      %p98 = scmp.eq.s32.totalorder %s97, 0
      %s100 = sadd.s32 %s99, 1
      %s101 = scalar_select %p98, %s99, %s100
      %p104 = pneg %p98
      %p105 = scmp.eq.s32.totalorder %s13, 1
      %p106 = por %p104, %p105
      %p107 = scmp.ne.s32.totalorder %s99, %s102
      %p108 = scmp.eq.s32.totalorder %s13, 0
      %p109 = por %p107, %p108
      %p110 = scmp.ne.s32.totalorder %s99, %s102
      %p111 = scmp.eq.s32.totalorder %s18, 1
      %p112 = por %p110, %p111
      %p113 = scmp.ne.s32.totalorder %s102, %s103
      %p114 = scmp.eq.s32.totalorder %s18, 0
      %p115 = por %p113, %p114
      %p116 = scmp.ne.s32.totalorder %s102, %s103
      %p117 = scmp.eq.s32.totalorder %s19, 1
      %p118 = por %p116, %p117
      %p120 = scmp.ne.s32.totalorder %s103, %s119
      %p121 = scmp.eq.s32.totalorder %s19, 0
      %p122 = por %p120, %p121
      %s123 = ssub.s32 %s20, %s32
      %p124 = scmp.eq.s32.totalorder %s123, 0
      %s126 = sadd.s32 %s125, 1
      %s127 = scalar_select %p124, %s125, %s126
      %p130 = pneg %p124
      %p131 = scmp.eq.s32.totalorder %s13, 1
      %p132 = por %p130, %p131
      %p133 = scmp.ne.s32.totalorder %s125, %s128
      %p134 = scmp.eq.s32.totalorder %s13, 0
      %p135 = por %p133, %p134
      %p136 = scmp.ne.s32.totalorder %s125, %s128
      %p137 = scmp.eq.s32.totalorder %s18, 1
      %p138 = por %p136, %p137
      %p139 = scmp.ne.s32.totalorder %s128, %s129
      %p140 = scmp.eq.s32.totalorder %s18, 0
      %p141 = por %p139, %p140
      %p142 = scmp.ne.s32.totalorder %s128, %s129
      %p143 = scmp.eq.s32.totalorder %s19, 1
      %p144 = por %p142, %p143
      %p146 = scmp.ne.s32.totalorder %s129, %s145
      %p147 = scmp.eq.s32.totalorder %s19, 0
      %p148 = por %p146, %p147
      %p149 = scmp.le.s32.totalorder 1, %s13
      %p150 = scmp.lt.s32.totalorder %s13, 3
      %p151 = pnand %p149, %p150
      %p152 = pneg %p151
      // Predicated region
      $region9: #{tpu_custom_call.1} parent=5 // pred_check
        _
      $region10: #{tpu_custom_call.1} parent=5 // pred_check_branch
        %154 = sbr.rel (%p151) target = $region12
      $region11: #{tpu_custom_call.1} parent=5 // pred_region
        %s155 = ssub.s32 %s13, 1
      $region12: #{tpu_custom_call.1} parent=5 // pred_fallthru
        _
      %p156 = scmp.lt.s32.totalorder %s13, 2
      // Predicated region
      $region13: #{tpu_custom_call.1} parent=5 // pred_check
        %p157 = pneg %p156
      $region14: #{tpu_custom_call.1} parent=5 // pred_check_branch
        %159 = sbr.rel (%p157) target = $region16
      $region15: #{tpu_custom_call.1} parent=5 // pred_region
        // Predicated region
        $region17: #{tpu_custom_call.1} parent=15 // pred_check
          %p160 = pneg %p51
        $region18: #{tpu_custom_call.1} parent=15 // pred_check_branch
          %162 = sbr.rel (%p160) target = $region20
        $region19: #{tpu_custom_call.1} parent=15 // pred_region
          %s163 = sadd.s32 %s20, %s21
          %p164 = scmp.lt.s32.totalorder %s163, 1
          %s165 = scalar_select %p164, %s163, 1
          %s166 = smul.u32 32, %s165
          %s167 = ssub.s32 38, %s166
          %p168 = scmp.lt.s32.totalorder %s167, 32
          %s169 = scalar_select %p168, %s167, 32
          %s170 = smul.u32 8, %s169
          %p171 = scmp.lt.s32.totalorder %s166, 37
          %s172 = scalar_select %p171, %s166, 37
          %s173 = smul.addr %s172, 8
          %s174 = scalar_lea.vmem %s0, %s173
          %s175 = sadd.s32 %s20, %s21
          %p176 = scmp.lt.s32.totalorder %s175, 1
          %s177 = scalar_select %p176, %s175, 1
          %s178 = smul.u32 32, %s177
          %s179 = ssub.s32 38, %s178
          %p180 = scmp.lt.s32.totalorder %s179, 32
          %s181 = scalar_select %p180, %s179, 32
          %s182 = smul.u32 8, %s181
        $region20: #{tpu_custom_call.1} parent=15 // pred_fallthru
          _
        // Predicated region
        $region21: #{tpu_custom_call.1} parent=15 // pred_check
          %p183 = pneg %p83
        $region22: #{tpu_custom_call.1} parent=15 // pred_check_branch
          %185 = sbr.rel (%p183) target = $region24
        $region23: #{tpu_custom_call.1} parent=15 // pred_region
          %s186 = sadd.s32 %s20, %s21
          %p187 = scmp.lt.s32.totalorder %s186, 1
          %s188 = scalar_select %p187, %s186, 1
          %s189 = smul.u32 2, %s188
          %s190 = ssub.s32 3, %s189
          %p191 = scmp.lt.s32.totalorder %s190, 2
          %s192 = scalar_select %p191, %s190, 2
          %p193 = scmp.lt.s32.totalorder %s189, 2
          %s194 = scalar_select %p193, %s189, 2
          %s195 = scalar_lea.vmem %s1, %s194
          %s196 = sadd.s32 %s20, %s21
          %p197 = scmp.lt.s32.totalorder %s196, 1
          %s198 = scalar_select %p197, %s196, 1
          %s199 = smul.u32 2, %s198
          %s200 = ssub.s32 3, %s199
          %p201 = scmp.lt.s32.totalorder %s200, 2
          %s202 = scalar_select %p201, %s200, 2
        $region24: #{tpu_custom_call.1} parent=15 // pred_fallthru
          _
      $region16: #{tpu_custom_call.1} parent=5 // pred_fallthru
        _
      %p203 = scmp.le.s32.totalorder 1, %s13
      %p204 = scmp.lt.s32.totalorder %s13, 3
      %p205 = pnand %p203, %p204
      %p206 = pneg %p205
      // Predicated region
      $region25: #{tpu_custom_call.1} parent=5 // pred_check
        _
      $region26: #{tpu_custom_call.1} parent=5 // pred_check_branch
        %208 = sbr.rel (%p205) target = $region28
      $region27: #{tpu_custom_call.1} parent=5 // pred_region
        %s209 = ssub.s32 %s13, 1
        %s210 = sadd.s32 %s22, %s23
        %p211 = scmp.lt.s32.totalorder %s210, 1
        %s212 = scalar_select %p211, %s210, 1
        %s213 = smul.u32 32, %s212
        %s214 = ssub.s32 38, %s213
        %p215 = scmp.lt.s32.totalorder %s214, 32
        %s216 = scalar_select %p215, %s214, 32
        %s217 = smul.u32 8, %s216
        %p218 = scmp.lt.s32.totalorder %s213, 37
        %s219 = scalar_select %p218, %s213, 37
        %s220 = smul.addr %s219, 8
        %s221 = scalar_lea.vmem %s0, %s220
        %p222 = pneg %p57
        %p223 = pneg %p54
        %s224 = sadd.s32 %s22, %s23
        %p225 = scmp.lt.s32.totalorder %s224, 1
        %s226 = scalar_select %p225, %s224, 1
        %s227 = smul.u32 2, %s226
        %s228 = ssub.s32 3, %s227
        %p229 = scmp.lt.s32.totalorder %s228, 2
        %s230 = scalar_select %p229, %s228, 2
        %p231 = scmp.lt.s32.totalorder %s227, 2
        %s232 = scalar_select %p231, %s227, 2
        %s233 = scalar_lea.vmem %s1, %s232
        %p234 = pneg %p89
        %p235 = pneg %p86
        %p236 = pneg %p115
        %p237 = pneg %p112
        %s238 = sand.u32 %s102, 1
        %s239 = scalar_lea.sflag [#allocation3], %s238
        %s240 = sand.u32 %s102, 1
        %s241 = smul.addr %s240, 4
        %s242 = scalar_lea.vmem [#allocation2], %s241
        %p243 = pneg %p141
        %p244 = pneg %p138
        %p245 = scmp.lt.s32.totalorder %s22, 1
        %s246 = scalar_select %p245, %s22, 1
        %s247 = smul.addr %s246, 4
        %s248 = scalar_lea.vmem %s3, %s247
        %s249 = sadd.s32 %s22, %s23
        %p250 = scmp.lt.s32.totalorder %s249, 1
        %s251 = scalar_select %p250, %s249, 1
        %s252 = smul.u32 32, %s251
        %s253 = ssub.s32 38, %s252
        %p254 = scmp.lt.s32.totalorder %s253, 32
        %s255 = scalar_select %p254, %s253, 32
        %s256 = smul.u32 8, %s255
        %p257 = scmp.lt.s32.totalorder %s252, 37
        %s258 = scalar_select %p257, %s252, 37
        %s259 = smul.addr %s258, 8
        %s260 = scalar_lea.vmem %s0, %s259
        %s261 = sadd.s32 %s22, %s23
        %p262 = scmp.lt.s32.totalorder %s261, 1
        %s263 = scalar_select %p262, %s261, 1
        %s264 = smul.u32 32, %s263
        %s265 = ssub.s32 38, %s264
        %p266 = scmp.lt.s32.totalorder %s265, 32
        %s267 = scalar_select %p266, %s265, 32
        %s268 = smul.u32 8, %s267
        %s269 = sadd.s32 %s22, %s23
        %p270 = scmp.lt.s32.totalorder %s269, 1
        %s271 = scalar_select %p270, %s269, 1
        %s272 = smul.u32 2, %s271
        %s273 = ssub.s32 3, %s272
        %p274 = scmp.lt.s32.totalorder %s273, 2
        %s275 = scalar_select %p274, %s273, 2
        %p276 = scmp.lt.s32.totalorder %s272, 2
        %s277 = scalar_select %p276, %s272, 2
        %s278 = scalar_lea.vmem %s1, %s277
        %s279 = sadd.s32 %s22, %s23
        %p280 = scmp.lt.s32.totalorder %s279, 1
        %s281 = scalar_select %p280, %s279, 1
        %s282 = smul.u32 2, %s281
        %s283 = ssub.s32 3, %s282
        %p284 = scmp.lt.s32.totalorder %s283, 2
        %s285 = scalar_select %p284, %s283, 2
        %p286 = scmp.lt.s32.totalorder %s22, 1
        %s287 = scalar_select %p286, %s22, 1
        %s288 = smul.addr %s287, 4
        %s289 = scalar_lea.vmem %s3, %s288
        %p290 = scmp.eq.s32.totalorder %s23, 0
        // Predicated region
        $region29: #{tpu_custom_call.1} parent=27 // pred_check
          %p291 = pneg %p290
        $region30: #{tpu_custom_call.1} parent=27 // pred_check_branch
          %293 = sbr.rel (%p291) target = $region32
        $region31: #{tpu_custom_call.1} parent=27 // pred_region
          %vm294 = vcmask 257024
          %295 = vst.msk [vmem:[%s242] sm:$0xf] %vm294, 0.0
          %vm296 = vcmask 11264
          %297 = vst.msk [vmem:[%s289] sm:$0xf] %vm296, 0.0
        $region32: #{tpu_custom_call.1} parent=27 // pred_fallthru
          _
        %s298 = sadd.s32 %s22, %s23
        %s299 = smul.u32 %s298, 256
        %v300 = vld [vmem:[%s260] sm:$0xff]
        %v301 = vld [vmem:[%s260 + $0x8] sm:$0xff]
        %v302 = vld [vmem:[%s260 + $0x10] sm:$0xff]
        %v303 = vld [vmem:[%s260 + $0x18] sm:$0xff]
        %v304 = vld [vmem:[%s260 + $0x20] sm:$0xff]
        %v305 = vld [vmem:[%s260 + $0x28] sm:$0xff]
        %v306 = vld [vmem:[%s260 + $0x30] sm:$0xff]
        %v307 = vld [vmem:[%s260 + $0x38] sm:$0xff]
        %v308 = vld [vmem:[%s260 + $0x40] sm:$0xff]
        %v309 = vld [vmem:[%s260 + $0x48] sm:$0xff]
        %v310 = vld [vmem:[%s260 + $0x50] sm:$0xff]
        %v311 = vld [vmem:[%s260 + $0x58] sm:$0xff]
        %v312 = vld [vmem:[%s260 + $0x60] sm:$0xff]
        %v313 = vld [vmem:[%s260 + $0x68] sm:$0xff]
        %v314 = vld [vmem:[%s260 + $0x70] sm:$0xff]
        %v315 = vld [vmem:[%s260 + $0x78] sm:$0xff]
        %v316 = vld [vmem:[%s260 + $0x80] sm:$0xff]
        %v317 = vld [vmem:[%s260 + $0x88] sm:$0xff]
        %v318 = vld [vmem:[%s260 + $0x90] sm:$0xff]
        %v319 = vld [vmem:[%s260 + $0x98] sm:$0xff]
        %v320 = vld [vmem:[%s260 + $0xa0] sm:$0xff]
        %v321 = vld [vmem:[%s260 + $0xa8] sm:$0xff]
        %v322 = vld [vmem:[%s260 + $0xb0] sm:$0xff]
        %v323 = vld [vmem:[%s260 + $0xb8] sm:$0xff]
        %v324 = vld [vmem:[%s260 + $0xc0] sm:$0xff]
        %v325 = vld [vmem:[%s260 + $0xc8] sm:$0xff]
        %v326 = vld [vmem:[%s260 + $0xd0] sm:$0xff]
        %v327 = vld [vmem:[%s260 + $0xd8] sm:$0xff]
        %v328 = vld [vmem:[%s260 + $0xe0] sm:$0xff]
        %v329 = vld [vmem:[%s260 + $0xe8] sm:$0xff]
        %v330 = vld [vmem:[%s260 + $0xf0] sm:$0xff]
        %v331 = vld [vmem:[%s260 + $0xf8] sm:$0xff]
        %v332 = vld [vmem:[%s278] sm:$0x3]
        %v333 = vlaneseq
        %v334 = vshrl.u32 %v333, 7
        %v335 = vadd.s32 %v334, 8
        %v336 = vadd.s32 %v334, 16
        %v337 = vadd.s32 %v334, 24
        %v338 = vadd.s32 %v334, 32
        %v339 = vadd.s32 %v334, 40
        %v340 = vadd.s32 %v334, 48
        %v341 = vadd.s32 %v334, 56
        %v342 = vadd.s32 %v334, 64
        %v343 = vadd.s32 %v334, 72
        %v344 = vadd.s32 %v334, 80
        %v345 = vadd.s32 %v334, 88
        %v346 = vadd.s32 %v334, 96
        %v347 = vadd.s32 %v334, 104
        %v348 = vadd.s32 %v334, 112
        %v349 = vadd.s32 %v334, 120
        %v350 = vadd.s32 %v334, 128
        %v351 = vadd.s32 %v334, 136
        %v352 = vadd.s32 %v334, 144
        %v353 = vadd.s32 %v334, 152
        %v354 = vadd.s32 %v334, 160
        %v355 = vadd.s32 %v334, 168
        %v356 = vadd.s32 %v334, 176
        %v357 = vadd.s32 %v334, 184
        %v358 = vadd.s32 %v334, 192
        %v359 = vadd.s32 %v334, 200
        %v360 = vadd.s32 %v334, 208
        %v361 = vadd.s32 %v334, 216
        %v362 = vadd.s32 %v334, 224
        %v363 = vadd.s32 %v334, 232
        %v364 = vadd.s32 %v334, 240
        %v365 = vadd.s32 %v334, 248
        %v366 = vlaneseq
        %v367 = vand.u32 %v366, 127
        %v368 = vadd.s32 %v367, 128
        %v369 = vstv %s299
        %v370 = vadd.s32 %v369, %v334
        %v371 = vadd.s32 %v369, %v335
        %v372 = vadd.s32 %v369, %v336
        %v373 = vadd.s32 %v369, %v337
        %v374 = vadd.s32 %v369, %v338
        %v375 = vadd.s32 %v369, %v339
        %v376 = vadd.s32 %v369, %v340
        %v377 = vadd.s32 %v369, %v341
        %v378 = vadd.s32 %v369, %v342
        %v379 = vadd.s32 %v369, %v343
        %v380 = vadd.s32 %v369, %v344
        %v381 = vadd.s32 %v369, %v345
        %v382 = vadd.s32 %v369, %v346
        %v383 = vadd.s32 %v369, %v347
        %v384 = vadd.s32 %v369, %v348
        %v385 = vadd.s32 %v369, %v349
        %v386 = vadd.s32 %v369, %v350
        %v387 = vadd.s32 %v369, %v351
        %v388 = vadd.s32 %v369, %v352
        %v389 = vadd.s32 %v369, %v353
        %v390 = vadd.s32 %v369, %v354
        %v391 = vadd.s32 %v369, %v355
        %v392 = vadd.s32 %v369, %v356
        %v393 = vadd.s32 %v369, %v357
        %v394 = vadd.s32 %v369, %v358
        %v395 = vadd.s32 %v369, %v359
        %v396 = vadd.s32 %v369, %v360
        %v397 = vadd.s32 %v369, %v361
        %v398 = vadd.s32 %v369, %v362
        %v399 = vadd.s32 %v369, %v363
        %v400 = vadd.s32 %v369, %v364
        %v401 = vadd.s32 %v369, %v365
        %vm402 = vcmp.lt.s32.totalorder %v370, 300
        %vm403 = vcmp.lt.s32.totalorder %v371, 300
        %vm404 = vcmp.lt.s32.totalorder %v372, 300
        %vm405 = vcmp.lt.s32.totalorder %v373, 300
        %vm406 = vcmp.lt.s32.totalorder %v374, 300
        %vm407 = vcmp.lt.s32.totalorder %v375, 300
        %vm408 = vcmp.lt.s32.totalorder %v376, 300
        %vm409 = vcmp.lt.s32.totalorder %v377, 300
        %vm410 = vcmp.lt.s32.totalorder %v378, 300
        %vm411 = vcmp.lt.s32.totalorder %v379, 300
        %vm412 = vcmp.lt.s32.totalorder %v380, 300
        %vm413 = vcmp.lt.s32.totalorder %v381, 300
        %vm414 = vcmp.lt.s32.totalorder %v382, 300
        %vm415 = vcmp.lt.s32.totalorder %v383, 300
        %vm416 = vcmp.lt.s32.totalorder %v384, 300
        %vm417 = vcmp.lt.s32.totalorder %v385, 300
        %vm418 = vcmp.lt.s32.totalorder %v386, 300
        %vm419 = vcmp.lt.s32.totalorder %v387, 300
        %vm420 = vcmp.lt.s32.totalorder %v388, 300
        %vm421 = vcmp.lt.s32.totalorder %v389, 300
        %vm422 = vcmp.lt.s32.totalorder %v390, 300
        %vm423 = vcmp.lt.s32.totalorder %v391, 300
        %vm424 = vcmp.lt.s32.totalorder %v392, 300
        %vm425 = vcmp.lt.s32.totalorder %v393, 300
        %vm426 = vcmp.lt.s32.totalorder %v394, 300
        %vm427 = vcmp.lt.s32.totalorder %v395, 300
        %vm428 = vcmp.lt.s32.totalorder %v396, 300
        %vm429 = vcmp.lt.s32.totalorder %v397, 300
        %vm430 = vcmp.lt.s32.totalorder %v398, 300
        %vm431 = vcmp.lt.s32.totalorder %v399, 300
        %vm432 = vcmp.lt.s32.totalorder %v400, 300
        %vm433 = vcmp.lt.s32.totalorder %v401, 300
        %v434 = vadd.s32 %v369, %v367
        %v435 = vadd.s32 %v369, %v368
        %vm436 = vcmp.lt.s32.totalorder %v434, 300
        %vm437 = vcmp.lt.s32.totalorder %v435, 300
        %v438 = vsel %vm402, 1, 0
        %v439 = vsel %vm403, 1, 0
        %v440 = vsel %vm404, 1, 0
        %v441 = vsel %vm405, 1, 0
        %v442 = vsel %vm406, 1, 0
        %v443 = vsel %vm407, 1, 0
        %v444 = vsel %vm408, 1, 0
        %v445 = vsel %vm409, 1, 0
        %v446 = vsel %vm410, 1, 0
        %v447 = vsel %vm411, 1, 0
        %v448 = vsel %vm412, 1, 0
        %v449 = vsel %vm413, 1, 0
        %v450 = vsel %vm414, 1, 0
        %v451 = vsel %vm415, 1, 0
        %v452 = vsel %vm416, 1, 0
        %v453 = vsel %vm417, 1, 0
        %v454 = vsel %vm418, 1, 0
        %v455 = vsel %vm419, 1, 0
        %v456 = vsel %vm420, 1, 0
        %v457 = vsel %vm421, 1, 0
        %v458 = vsel %vm422, 1, 0
        %v459 = vsel %vm423, 1, 0
        %v460 = vsel %vm424, 1, 0
        %v461 = vsel %vm425, 1, 0
        %v462 = vsel %vm426, 1, 0
        %v463 = vsel %vm427, 1, 0
        %v464 = vsel %vm428, 1, 0
        %v465 = vsel %vm429, 1, 0
        %v466 = vsel %vm430, 1, 0
        %v467 = vsel %vm431, 1, 0
        %v468 = vsel %vm432, 1, 0
        %v469 = vsel %vm433, 1, 0
        %vm470 = vcmp.eq.s32.totalorder %v438, 1
        %vm471 = vcmp.eq.s32.totalorder %v439, 1
        %vm472 = vcmp.eq.s32.totalorder %v440, 1
        %vm473 = vcmp.eq.s32.totalorder %v441, 1
        %vm474 = vcmp.eq.s32.totalorder %v442, 1
        %vm475 = vcmp.eq.s32.totalorder %v443, 1
        %vm476 = vcmp.eq.s32.totalorder %v444, 1
        %vm477 = vcmp.eq.s32.totalorder %v445, 1
        %vm478 = vcmp.eq.s32.totalorder %v446, 1
        %vm479 = vcmp.eq.s32.totalorder %v447, 1
        %vm480 = vcmp.eq.s32.totalorder %v448, 1
        %vm481 = vcmp.eq.s32.totalorder %v449, 1
        %vm482 = vcmp.eq.s32.totalorder %v450, 1
        %vm483 = vcmp.eq.s32.totalorder %v451, 1
        %vm484 = vcmp.eq.s32.totalorder %v452, 1
        %vm485 = vcmp.eq.s32.totalorder %v453, 1
        %vm486 = vcmp.eq.s32.totalorder %v454, 1
        %vm487 = vcmp.eq.s32.totalorder %v455, 1
        %vm488 = vcmp.eq.s32.totalorder %v456, 1
        %vm489 = vcmp.eq.s32.totalorder %v457, 1
        %vm490 = vcmp.eq.s32.totalorder %v458, 1
        %vm491 = vcmp.eq.s32.totalorder %v459, 1
        %vm492 = vcmp.eq.s32.totalorder %v460, 1
        %vm493 = vcmp.eq.s32.totalorder %v461, 1
        %vm494 = vcmp.eq.s32.totalorder %v462, 1
        %vm495 = vcmp.eq.s32.totalorder %v463, 1
        %vm496 = vcmp.eq.s32.totalorder %v464, 1
        %vm497 = vcmp.eq.s32.totalorder %v465, 1
        %vm498 = vcmp.eq.s32.totalorder %v466, 1
        %vm499 = vcmp.eq.s32.totalorder %v467, 1
        %vm500 = vcmp.eq.s32.totalorder %v468, 1
        %vm501 = vcmp.eq.s32.totalorder %v469, 1
        %v502 = vsel %vm470, %v300, 0.0
        %v503 = vsel %vm471, %v301, 0.0
        %v504 = vsel %vm472, %v302, 0.0
        %v505 = vsel %vm473, %v303, 0.0
        %v506 = vsel %vm474, %v304, 0.0
        %v507 = vsel %vm475, %v305, 0.0
        %v508 = vsel %vm476, %v306, 0.0
        %v509 = vsel %vm477, %v307, 0.0
        %v510 = vsel %vm478, %v308, 0.0
        %v511 = vsel %vm479, %v309, 0.0
        %v512 = vsel %vm480, %v310, 0.0
        %v513 = vsel %vm481, %v311, 0.0
        %v514 = vsel %vm482, %v312, 0.0
        %v515 = vsel %vm483, %v313, 0.0
        %v516 = vsel %vm484, %v314, 0.0
        %v517 = vsel %vm485, %v315, 0.0
        %v518 = vsel %vm486, %v316, 0.0
        %v519 = vsel %vm487, %v317, 0.0
        %v520 = vsel %vm488, %v318, 0.0
        %v521 = vsel %vm489, %v319, 0.0
        %v522 = vsel %vm490, %v320, 0.0
        %v523 = vsel %vm491, %v321, 0.0
        %v524 = vsel %vm492, %v322, 0.0
        %v525 = vsel %vm493, %v323, 0.0
        %v526 = vsel %vm494, %v324, 0.0
        %v527 = vsel %vm495, %v325, 0.0
        %v528 = vsel %vm496, %v326, 0.0
        %v529 = vsel %vm497, %v327, 0.0
        %v530 = vsel %vm498, %v328, 0.0
        %v531 = vsel %vm499, %v329, 0.0
        %v532 = vsel %vm500, %v330, 0.0
        %v533 = vsel %vm501, %v331, 0.0
        %v534 = vperm.slane %v332, 0
        %v535 = vperm.slane %v332, 1
        %vm536 = vcmp.eq.s32.totalorder %v534, %v334
        %vm537 = vcmp.eq.s32.totalorder %v535, %v334
        %v538 = vsel %vm436, 1, 0
        %v539 = vsel %vm437, 1, 0
        %vm540 = vcmp.eq.s32.totalorder %v538, 1
        %vm541 = vcmp.eq.s32.totalorder %v539, 1
        %vm542 = vmand %vm536, %vm540
        %vm543 = vmand %vm537, %vm541
        %v544 = vsel %vm542, 1, 0
        %v545 = vsel %vm543, 1, 0
        %v546 = vcvt.s32.f32 %v544
        %v547 = vcvt.s32.f32 %v545
        %v548 = vld [vmem:[%s242] sm:$0xf]
        %549 = vmatpush.msra.mxu0 %v517
        %550 = vmatpush.msra.mxu0 %v516
        %551 = vmatpush.msra.mxu0 %v515
        %552 = vmatpush.msra.mxu0 %v514
        %553 = vmatpush.msra.mxu0 %v513
        %554 = vmatpush.msra.mxu0 %v512
        %555 = vmatpush.msra.mxu0 %v511
        %556 = vmatpush.msra.mxu0 %v510
        %557 = vmatpush.msra.mxu0 %v509
        %558 = vmatpush.msra.mxu0 %v508
        %559 = vmatpush.msra.mxu0 %v507
        %560 = vmatpush.msra.mxu0 %v506
        %561 = vmatpush.msra.mxu0 %v505
        %562 = vmatpush.msra.mxu0 %v504
        %563 = vmatpush.msra.mxu0 %v503
        %564 = vmatpush.msra.mxu0 %v502
        %565 = vmatmul.f32.gmra.mxu0 %v546
        %v566 = vpop.f32.mrf.mxu0
        %v567 = vadd.f32 0.0, %v566
        %568 = vdwg.mxu0
        %569 = vmatpush.msra.mxu0 %v533
        %570 = vmatpush.msra.mxu0 %v532
        %571 = vmatpush.msra.mxu0 %v531
        %572 = vmatpush.msra.mxu0 %v530
        %573 = vmatpush.msra.mxu0 %v529
        %574 = vmatpush.msra.mxu0 %v528
        %575 = vmatpush.msra.mxu0 %v527
        %576 = vmatpush.msra.mxu0 %v526
        %577 = vmatpush.msra.mxu0 %v525
        %578 = vmatpush.msra.mxu0 %v524
        %579 = vmatpush.msra.mxu0 %v523
        %580 = vmatpush.msra.mxu0 %v522
        %581 = vmatpush.msra.mxu0 %v521
        %582 = vmatpush.msra.mxu0 %v520
        %583 = vmatpush.msra.mxu0 %v519
        %584 = vmatpush.msra.mxu0 %v518
        %585 = vmatmul.f32.gmra.mxu0 %v547
        %v586 = vpop.f32.mrf.mxu0
        %v587 = vadd.f32 %v567, %v586
        %588 = vdwg.mxu0
        %v589 = vadd.f32 %v548, %v587
        %vm590 = vcmask 257024
        %591 = vst.msk [vmem:[%s242] sm:$0xf] %vm590, %v589
        %v592 = vmul.f32 %v502, %v502
        %v593 = vmul.f32 %v503, %v503
        %v594 = vmul.f32 %v504, %v504
        %v595 = vmul.f32 %v505, %v505
        %v596 = vmul.f32 %v506, %v506
        %v597 = vmul.f32 %v507, %v507
        %v598 = vmul.f32 %v508, %v508
        %v599 = vmul.f32 %v509, %v509
        %v600 = vmul.f32 %v510, %v510
        %v601 = vmul.f32 %v511, %v511
        %v602 = vmul.f32 %v512, %v512
        %v603 = vmul.f32 %v513, %v513
        %v604 = vmul.f32 %v514, %v514
        %v605 = vmul.f32 %v515, %v515
        %v606 = vmul.f32 %v516, %v516
        %v607 = vmul.f32 %v517, %v517
        %v608 = vmul.f32 %v518, %v518
        %v609 = vmul.f32 %v519, %v519
        %v610 = vmul.f32 %v520, %v520
        %v611 = vmul.f32 %v521, %v521
        %v612 = vmul.f32 %v522, %v522
        %v613 = vmul.f32 %v523, %v523
        %v614 = vmul.f32 %v524, %v524
        %v615 = vmul.f32 %v525, %v525
        %v616 = vmul.f32 %v526, %v526
        %v617 = vmul.f32 %v527, %v527
        %v618 = vmul.f32 %v528, %v528
        %v619 = vmul.f32 %v529, %v529
        %v620 = vmul.f32 %v530, %v530
        %v621 = vmul.f32 %v531, %v531
        %v622 = vmul.f32 %v532, %v532
        %v623 = vmul.f32 %v533, %v533
        %vm624 = vcmask 261120
        %v625 = vsel %vm624, %v592, 0.0
        %626 = vadd.xlane.f32.xlu0 %v625
        %v627 = vpop.xlane.xlu0 %626
        %v628 = vsel %vm624, %v593, 0.0
        %629 = vadd.xlane.f32.xlu0 %v628
        %v630 = vpop.xlane.xlu0 %629
        %v631 = vsel %vm624, %v594, 0.0
        %632 = vadd.xlane.f32.xlu0 %v631
        %v633 = vpop.xlane.xlu0 %632
        %v634 = vsel %vm624, %v595, 0.0
        %635 = vadd.xlane.f32.xlu0 %v634
        %v636 = vpop.xlane.xlu0 %635
        %v637 = vsel %vm624, %v596, 0.0
        %638 = vadd.xlane.f32.xlu0 %v637
        %v639 = vpop.xlane.xlu0 %638
        %v640 = vsel %vm624, %v597, 0.0
        %641 = vadd.xlane.f32.xlu0 %v640
        %v642 = vpop.xlane.xlu0 %641
        %v643 = vsel %vm624, %v598, 0.0
        %644 = vadd.xlane.f32.xlu0 %v643
        %v645 = vpop.xlane.xlu0 %644
        %v646 = vsel %vm624, %v599, 0.0
        %647 = vadd.xlane.f32.xlu0 %v646
        %v648 = vpop.xlane.xlu0 %647
        %v649 = vsel %vm624, %v600, 0.0
        %650 = vadd.xlane.f32.xlu0 %v649
        %v651 = vpop.xlane.xlu0 %650
        %v652 = vsel %vm624, %v601, 0.0
        %653 = vadd.xlane.f32.xlu0 %v652
        %v654 = vpop.xlane.xlu0 %653
        %v655 = vsel %vm624, %v602, 0.0
        %656 = vadd.xlane.f32.xlu0 %v655
        %v657 = vpop.xlane.xlu0 %656
        %v658 = vsel %vm624, %v603, 0.0
        %659 = vadd.xlane.f32.xlu0 %v658
        %v660 = vpop.xlane.xlu0 %659
        %v661 = vsel %vm624, %v604, 0.0
        %662 = vadd.xlane.f32.xlu0 %v661
        %v663 = vpop.xlane.xlu0 %662
        %v664 = vsel %vm624, %v605, 0.0
        %665 = vadd.xlane.f32.xlu0 %v664
        %v666 = vpop.xlane.xlu0 %665
        %v667 = vsel %vm624, %v606, 0.0
        %668 = vadd.xlane.f32.xlu0 %v667
        %v669 = vpop.xlane.xlu0 %668
        %v670 = vsel %vm624, %v607, 0.0
        %671 = vadd.xlane.f32.xlu0 %v670
        %v672 = vpop.xlane.xlu0 %671
        %v673 = vsel %vm624, %v608, 0.0
        %674 = vadd.xlane.f32.xlu0 %v673
        %v675 = vpop.xlane.xlu0 %674
        %v676 = vsel %vm624, %v609, 0.0
        %677 = vadd.xlane.f32.xlu0 %v676
        %v678 = vpop.xlane.xlu0 %677
        %v679 = vsel %vm624, %v610, 0.0
        %680 = vadd.xlane.f32.xlu0 %v679
        %v681 = vpop.xlane.xlu0 %680
        %v682 = vsel %vm624, %v611, 0.0
        %683 = vadd.xlane.f32.xlu0 %v682
        %v684 = vpop.xlane.xlu0 %683
        %v685 = vsel %vm624, %v612, 0.0
        %686 = vadd.xlane.f32.xlu0 %v685
        %v687 = vpop.xlane.xlu0 %686
        %v688 = vsel %vm624, %v613, 0.0
        %689 = vadd.xlane.f32.xlu0 %v688
        %v690 = vpop.xlane.xlu0 %689
        %v691 = vsel %vm624, %v614, 0.0
        %692 = vadd.xlane.f32.xlu0 %v691
        %v693 = vpop.xlane.xlu0 %692
        %v694 = vsel %vm624, %v615, 0.0
        %695 = vadd.xlane.f32.xlu0 %v694
        %v696 = vpop.xlane.xlu0 %695
        %v697 = vsel %vm624, %v616, 0.0
        %698 = vadd.xlane.f32.xlu0 %v697
        %v699 = vpop.xlane.xlu0 %698
        %v700 = vsel %vm624, %v617, 0.0
        %701 = vadd.xlane.f32.xlu0 %v700
        %v702 = vpop.xlane.xlu0 %701
        %v703 = vsel %vm624, %v618, 0.0
        %704 = vadd.xlane.f32.xlu0 %v703
        %v705 = vpop.xlane.xlu0 %704
        %v706 = vsel %vm624, %v619, 0.0
        %707 = vadd.xlane.f32.xlu0 %v706
        %v708 = vpop.xlane.xlu0 %707
        %v709 = vsel %vm624, %v620, 0.0
        %710 = vadd.xlane.f32.xlu0 %v709
        %v711 = vpop.xlane.xlu0 %710
        %v712 = vsel %vm624, %v621, 0.0
        %713 = vadd.xlane.f32.xlu0 %v712
        %v714 = vpop.xlane.xlu0 %713
        %v715 = vsel %vm624, %v622, 0.0
        %716 = vadd.xlane.f32.xlu0 %v715
        %v717 = vpop.xlane.xlu0 %716
        %v718 = vsel %vm624, %v623, 0.0
        %719 = vadd.xlane.f32.xlu0 %v718
        %v720 = vpop.xlane.xlu0 %719
        %vm721 = vcmp.eq.s32.totalorder %v367, 0
        %v722 = vsel %vm721, %v627, 1.0
        %v723 = vsel %vm721, %v630, 1.0
        %v724 = vsel %vm721, %v633, 1.0
        %v725 = vsel %vm721, %v636, 1.0
        %v726 = vsel %vm721, %v639, 1.0
        %v727 = vsel %vm721, %v642, 1.0
        %v728 = vsel %vm721, %v645, 1.0
        %v729 = vsel %vm721, %v648, 1.0
        %v730 = vsel %vm721, %v651, 1.0
        %v731 = vsel %vm721, %v654, 1.0
        %v732 = vsel %vm721, %v657, 1.0
        %v733 = vsel %vm721, %v660, 1.0
        %v734 = vsel %vm721, %v663, 1.0
        %v735 = vsel %vm721, %v666, 1.0
        %v736 = vsel %vm721, %v669, 1.0
        %v737 = vsel %vm721, %v672, 1.0
        %v738 = vsel %vm721, %v675, 1.0
        %v739 = vsel %vm721, %v678, 1.0
        %v740 = vsel %vm721, %v681, 1.0
        %v741 = vsel %vm721, %v684, 1.0
        %v742 = vsel %vm721, %v687, 1.0
        %v743 = vsel %vm721, %v690, 1.0
        %v744 = vsel %vm721, %v693, 1.0
        %v745 = vsel %vm721, %v696, 1.0
        %v746 = vsel %vm721, %v699, 1.0
        %v747 = vsel %vm721, %v702, 1.0
        %v748 = vsel %vm721, %v705, 1.0
        %v749 = vsel %vm721, %v708, 1.0
        %v750 = vsel %vm721, %v711, 1.0
        %v751 = vsel %vm721, %v714, 1.0
        %v752 = vsel %vm721, %v717, 1.0
        %v753 = vsel %vm721, %v720, 1.0
        %v754 = vld [vmem:[%s289] sm:$0xf]
        %755 = vmatpush.msra.mxu0 %v737
        %756 = vmatpush.msra.mxu0 %v736
        %757 = vmatpush.msra.mxu0 %v735
        %758 = vmatpush.msra.mxu0 %v734
        %759 = vmatpush.msra.mxu0 %v733
        %760 = vmatpush.msra.mxu0 %v732
        %761 = vmatpush.msra.mxu0 %v731
        %762 = vmatpush.msra.mxu0 %v730
        %763 = vmatpush.msra.mxu0 %v729
        %764 = vmatpush.msra.mxu0 %v728
        %765 = vmatpush.msra.mxu0 %v727
        %766 = vmatpush.msra.mxu0 %v726
        %767 = vmatpush.msra.mxu0 %v725
        %768 = vmatpush.msra.mxu0 %v724
        %769 = vmatpush.msra.mxu0 %v723
        %770 = vmatpush.msra.mxu0 %v722
        %771 = vmatmul.f32.gmra.mxu0 %v546
        %v772 = vpop.f32.mrf.mxu0
        %v773 = vadd.f32 0.0, %v772
        %774 = vdwg.mxu0
        %775 = vmatpush.msra.mxu0 %v753
        %776 = vmatpush.msra.mxu0 %v752
        %777 = vmatpush.msra.mxu0 %v751
        %778 = vmatpush.msra.mxu0 %v750
        %779 = vmatpush.msra.mxu0 %v749
        %780 = vmatpush.msra.mxu0 %v748
        %781 = vmatpush.msra.mxu0 %v747
        %782 = vmatpush.msra.mxu0 %v746
        %783 = vmatpush.msra.mxu0 %v745
        %784 = vmatpush.msra.mxu0 %v744
        %785 = vmatpush.msra.mxu0 %v743
        %786 = vmatpush.msra.mxu0 %v742
        %787 = vmatpush.msra.mxu0 %v741
        %788 = vmatpush.msra.mxu0 %v740
        %789 = vmatpush.msra.mxu0 %v739
        %790 = vmatpush.msra.mxu0 %v738
        %791 = vmatmul.f32.gmra.mxu0 %v547
        %v792 = vpop.f32.mrf.mxu0
        %v793 = vadd.f32 %v773, %v792
        %794 = vdwg.mxu0
        %v795 = vadd.f32 %v754, %v793
        %vm796 = vcmask 11264
        %797 = vst.msk [vmem:[%s289] sm:$0xf] %vm796, %v795
        %s798 = sand.u32 %s102, 1
        %s799 = scalar_lea.sflag [#allocation3], %s798
        %s800 = sand.u32 %s102, 1
        %s801 = smul.addr %s800, 4
        %s802 = scalar_lea.vmem [#allocation2], %s801
        %p803 = scmp.lt.s32.totalorder %s22, 1
        %s804 = scalar_select %p803, %s22, 1
        %s805 = smul.addr %s804, 4
        %s806 = scalar_lea.vmem %s3, %s805
        // Predicated region
        $region33: #{tpu_custom_call.1} parent=27 // pred_check
          %p807 = pneg %p112
        $region34: #{tpu_custom_call.1} parent=27 // pred_check_branch
          %809 = sbr.rel (%p807) target = $region36
        $region35: #{tpu_custom_call.1} parent=27 // pred_region
          %811 = vsyncadd %s799, 0
          %s812 = smul.addr %s22, 4
          %s813 = scalar_lea.hbm %s2, %s812
          %s815 = sshll.u32 %s802, 4
          %s816 = int_to_ptr.vmem [resolvable:$true] %s815
          %s817 = sshll.u32 %s813, 4
          %s818 = int_to_ptr.hbm [resolvable:$true] %s817
          %820 = dma.vmem_to_hbm [thread:$0]  %s816, 64, %s818, %s799
        $region36: #{tpu_custom_call.1} parent=27 // pred_fallthru
          _
        // Predicated region
        $region37: #{tpu_custom_call.1} parent=27 // pred_check
          %p821 = pneg %p138
        $region38: #{tpu_custom_call.1} parent=27 // pred_check_branch
          %823 = sbr.rel (%p821) target = $region40
        $region39: #{tpu_custom_call.1} parent=27 // pred_region
          _
        $region40: #{tpu_custom_call.1} parent=27 // pred_fallthru
          _
      $region28: #{tpu_custom_call.1} parent=5 // pred_fallthru
        _
      %p824 = scmp.le.s32.totalorder 2, %s13
      // Predicated region
      $region41: #{tpu_custom_call.1} parent=5 // pred_check
        %p825 = pneg %p824
      $region42: #{tpu_custom_call.1} parent=5 // pred_check_branch
        %827 = sbr.rel (%p825) target = $region44
      $region43: #{tpu_custom_call.1} parent=5 // pred_region
        %s828 = ssub.s32 %s13, 2
        // Predicated region
        $region45: #{tpu_custom_call.1} parent=43 // pred_check
          %p829 = pneg %p118
        $region46: #{tpu_custom_call.1} parent=43 // pred_check_branch
          %831 = sbr.rel (%p829) target = $region48
        $region47: #{tpu_custom_call.1} parent=43 // pred_region
          %s832 = sand.u32 %s103, 1
          %s833 = scalar_lea.sflag [#allocation3], %s832
          %s834 = sand.u32 %s103, 1
          %s835 = smul.addr %s834, 4
          %s836 = scalar_lea.vmem [#allocation2], %s835
          %838 = dma.done %s833, 64
        $region48: #{tpu_custom_call.1} parent=43 // pred_fallthru
          _
        // Predicated region
        $region49: #{tpu_custom_call.1} parent=43 // pred_check
          %p839 = pneg %p144
        $region50: #{tpu_custom_call.1} parent=43 // pred_check_branch
          %841 = sbr.rel (%p839) target = $region52
        $region51: #{tpu_custom_call.1} parent=43 // pred_region
          %p842 = scmp.lt.s32.totalorder %s24, 1
          %s843 = scalar_select %p842, %s24, 1
          %s844 = smul.addr %s843, 4
          %s845 = scalar_lea.vmem %s3, %s844
        $region52: #{tpu_custom_call.1} parent=43 // pred_fallthru
          _
      $region44: #{tpu_custom_call.1} parent=5 // pred_fallthru
        _
    $region6: #{tpu_custom_call.1} parent=1 // loop_footer
      %s17 = sadd.s32 1, %s13
    $region7: #{tpu_custom_call.1} parent=1 // loop_footer_branch
      %12 = sbr.rel target = $region3
    $region8: #{tpu_custom_call.1} parent=1 // loop_exit
      _
    %846 = vsyncpa [#allocation3], 1
    %s847 = scalar_lea.sflag [#allocation3], 1
    %848 = vsyncpa %s847, 1

</llo_original>
